<compile_context>
chip_gen: v7x
topology: tpu7x:2x2x1
jax: 0.10.0
libtpu: 0.0.40
codegen_flags: <defaults>
</compile_context>

<pallas_src>
import functools

import jax
import jax.numpy as jnp
from jax.experimental import pallas as pl
from jax.experimental.pallas import tpu as pltpu


def _h_sigmoid_kernel(x_ref, o_ref):
    x = x_ref[...]
    # relu6(x + 3) / 6, kept in the native dtype (matches PyTorch dtype semantics).
    y = jnp.minimum(jnp.maximum(x + 3.0, 0.0), 6.0) * (1.0 / 6.0)
    o_ref[...] = y.astype(o_ref.dtype)


def _h_sigmoid_jnp(x):
    # Fused fallback path: exactly one HBM read + one write.
    return (jnp.minimum(jnp.maximum(x + 3.0, 0.0), 6.0) * (1.0 / 6.0)).astype(x.dtype)


def _tpu_defaults():
    """Trace-time (block_bytes, vmem_limit_bytes, num_tensorcores)."""
    vmem = None
    num_tc = 1
    try:
        info = pltpu.get_tpu_info()
        v = getattr(info, "vmem_capacity_bytes", None)
        if isinstance(v, int) and v > 0:
            vmem = v
        for attr in ("num_cores", "num_tensorcores", "tensorcores_per_chip",
                     "num_cores_per_chip"):
            c = getattr(info, attr, None)
            if isinstance(c, int) and c > 1:
                num_tc = c
                break
    except Exception:
        pass
    if vmem is None:
        vmem = 64 * 1024 * 1024  # conservative assumption: v7x per-TC VMEM
    if vmem >= 96 * 1024 * 1024:
        # v5e / v6e (128 MiB physical VMEM): 6 MiB blocks -> 24 MiB
        # double-buffered (in+out); explicit limit lifts v5e's 16 MiB default.
        return 6 * 1024 * 1024, 40 * 1024 * 1024, num_tc
    # v7x (64 MiB physical VMEM): 4 MiB blocks -> 16 MiB double-buffered,
    # scoped limit kept well under physical with room for Mosaic scratch.
    return 4 * 1024 * 1024, 28 * 1024 * 1024, num_tc


@functools.partial(jax.jit, static_argnames=("target_block_bytes",))
def h_sigmoid(x: jax.Array, *, target_block_bytes: int | None = None) -> jax.Array:
    """Elementwise hard-sigmoid relu6(x+3)/6; accepts any shape (e.g. NCHW)."""
    orig_shape = x.shape
    dtype = x.dtype
    n = x.size
    if n == 0:
        return x

    if not jnp.issubdtype(dtype, jnp.floating):
        # TODO(synk): PyTorch's true division promotes integer inputs to float;
        # mirror that on the (rare) non-float path with plain jnp.
        return _h_sigmoid_jnp(x.astype(jnp.float32))

    # Ragged sizes: a pad+slice path would add ~2 full HBM passes on a purely
    # bandwidth-bound op, so use the fused jnp expression instead (identical
    # traffic to the kernel). Typical conv activations never take this path.
    if n % 128 != 0:
        return _h_sigmoid_jnp(x)

    block_bytes, vmem_limit, num_tc = _tpu_defaults()
    if target_block_bytes is not None:
        block_bytes = int(target_block_bytes)

    itemsize = dtype.itemsize
    flat = x.reshape(-1)

    # Widest lane-dense slab width that divides n while keeping >= 8 rows:
    # wide rows -> big contiguous DMA descriptors, unmasked vst, fewer steps.
    width = 128
    for w in (8192, 4096, 2048, 1024, 512, 256):
        if n % w == 0 and n // w >= 8:
            width = w
            break
    rows = n // width
    x2d = flat.reshape(rows, width)

    # Sublane granularity of the block's second-to-last dim (dtype-packed).
    sublane = {4: 8, 2: 16, 1: 32}.get(itemsize, 8)

    # Block sizing: ~block_bytes per block, rounded to sublane granularity.
    tile_rows = max(sublane, block_bytes // (width * itemsize))
    tile_rows -= tile_rows % sublane
    if tile_rows >= rows:
        tile_rows = rows  # full extent: always a legal block dim
    num_blocks = pl.cdiv(rows, tile_rows)

    # Megacore load balance: only when the chip really has >1 TensorCore and
    # the block count is small enough that imbalance matters, make the block
    # count a multiple of the core count.
    if num_tc > 1 and rows >= num_tc * sublane and (
            num_blocks < 4 * num_tc or num_blocks % num_tc != 0):
        target_blocks = max(num_tc, pl.cdiv(num_blocks, num_tc) * num_tc)
        tr = pl.cdiv(rows, target_blocks)
        tr = max(sublane, tr + ((-tr) % sublane))
        tile_rows = min(tr, rows)
        num_blocks = pl.cdiv(rows, tile_rows)

    out2d = pl.pallas_call(
        _h_sigmoid_kernel,
        out_shape=jax.ShapeDtypeStruct((rows, width), dtype),
        grid_spec=pltpu.PrefetchScalarGridSpec(
            num_scalar_prefetch=0,
            grid=(num_blocks,),
            in_specs=[pl.BlockSpec((tile_rows, width), lambda i: (i, 0))],
            out_specs=pl.BlockSpec((tile_rows, width), lambda i: (i, 0)),
        ),
        compiler_params=pltpu.CompilerParams(
            dimension_semantics=("parallel",),
            vmem_limit_bytes=vmem_limit,
        ),
        cost_estimate=pl.CostEstimate(
            flops=3 * n, transcendentals=0, bytes_accessed=2 * n * itemsize),
    )(x2d)

    return out2d.reshape(orig_shape)


if __name__ == "__main__":
    key = jax.random.PRNGKey(0)

    # NCHW input, matching typical conv activations (aligned fast path).
    x = jax.random.normal(key, (2, 4, 16, 16), dtype=jnp.float32) * 4.0
    y = jax.block_until_ready(h_sigmoid(x))
    y_ref = jnp.clip(x + 3.0, 0.0, 6.0) / 6.0
    assert y.shape == x.shape and y.dtype == x.dtype
    assert jnp.allclose(y, y_ref, atol=1e-6, rtol=1e-6)

    # Aligned bf16 shape (exercises the kernel with 16-row sublane packing).
    xb = jax.random.normal(jax.random.PRNGKey(2), (2, 8, 16, 16), dtype=jnp.bfloat16)
    yb = jax.block_until_ready(h_sigmoid(xb))
    yb_ref = jnp.clip(xb + 3.0, 0.0, 6.0) * (1.0 / 6.0)
    assert yb.shape == xb.shape and yb.dtype == xb.dtype
    assert jnp.allclose(yb.astype(jnp.float32), yb_ref.astype(jnp.float32),
                        atol=1e-2, rtol=1e-2)

    # Ragged shape (n % 128 != 0): takes the fused jnp fallback, no padding passes.
    x2 = jax.random.normal(jax.random.PRNGKey(1), (3, 5, 7, 11), dtype=jnp.bfloat16)
    y2 = jax.block_until_ready(h_sigmoid(x2))
    y2_ref = jnp.clip(x2 + 3.0, 0.0, 6.0) * (1.0 / 6.0)
    assert y2.shape == x2.shape and y2.dtype == x2.dtype
    assert jnp.allclose(y2.astype(jnp.float32), y2_ref.astype(jnp.float32),
                        atol=1e-2, rtol=1e-2)

    print("KERNEL_OK")
</pallas_src>

<mosaic_0001>
module attributes {stable_mosaic.version = 11 : i64} {
  func.func @_h_sigmoid_kernel(%arg0: i32, %arg1: memref<8x256xf32, #tpu.memory_space<vmem>>, %arg2: memref<8x256xf32, #tpu.memory_space<vmem>>) attributes {dimension_semantics = [#tpu.dimension_semantics<parallel>], iteration_bounds = array<i64: 1>, scalar_prefetch = 0 : i64, scratch_operands = 0 : i64, tpu.core_type = #tpu.core_type<tc>, window_params = [{transform_indices = @transform_0, window_bounds = array<i64: 8, 256>}, {transform_indices = @transform_1, window_bounds = array<i64: 8, 256>}]} {
    %c0 = arith.constant 0 : index
    %c0_0 = arith.constant 0 : index
    %0 = vector.load %arg1[%c0, %c0_0] : memref<8x256xf32, #tpu.memory_space<vmem>>, vector<8x256xf32>
    %cst = arith.constant 3.000000e+00 : f32
    %1 = vector.broadcast %cst : f32 to vector<8x256xf32>
    %2 = arith.addf %0, %1 : vector<8x256xf32>
    %cst_1 = arith.constant 0.000000e+00 : f32
    %3 = vector.broadcast %cst_1 : f32 to vector<8x256xf32>
    %4 = arith.maximumf %2, %3 : vector<8x256xf32>
    %cst_2 = arith.constant 6.000000e+00 : f32
    %5 = vector.broadcast %cst_2 : f32 to vector<8x256xf32>
    %6 = arith.minimumf %4, %5 : vector<8x256xf32>
    %cst_3 = arith.constant 0.166666672 : f32
    %7 = vector.broadcast %cst_3 : f32 to vector<8x256xf32>
    %8 = arith.mulf %6, %7 : vector<8x256xf32>
    %c0_4 = arith.constant 0 : index
    %c0_5 = arith.constant 0 : index
    %9 = vector.load %arg2[%c0_4, %c0_5] : memref<8x256xf32, #tpu.memory_space<vmem>>, vector<8x256xf32>
    tpu.vector_store %arg2[%c0_4, %c0_5], %8 {strides = array<i32>} : memref<8x256xf32, #tpu.memory_space<vmem>>, vector<8x256xf32>,
    return
  }
  func.func @transform_0(%arg0: i32) -> (i32, i32) {
    %c0_i32 = arith.constant 0 : i32
    %c0_i32_0 = arith.constant 0 : i32
    return %arg0, %c0_i32 : i32, i32
  }
  func.func @transform_1(%arg0: i32) -> (i32, i32) {
    %c0_i32 = arith.constant 0 : i32
    %c0_i32_0 = arith.constant 0 : i32
    return %arg0, %c0_i32 : i32, i32
  }
}

</mosaic_0001>

<llo_original>
// kernel: h_sigmoid.1
$region0: #{h_sigmoid.1}
  #allocation0 [shape = 'u32[]', space=smem, size = 0x4, offset = 0x4, fixed_abs, tag = 'smem constant byte address 0x4 - core index']
  #allocation1 [shape = 'u32[144,128]{1,0:T(1,128)}', space=vmem, size = 0x12000, scoped, tag = 'internal scratch']
  %s0 = inlined_call_operand.vmem [shape: f32[8,256], index: 0, kind: input, shape index: {}]
  %s1 = inlined_call_operand.vmem [shape: f32[8,256], index: 1, kind: output, shape index: {}]
  %s2 = sld [smem:[#allocation0]]
  $region14: #{h_sigmoid.1} parent=0
    _
  %s4 = ssub.s32 1, %s2
  %s5 = scalar_select 0, %s4, %s2
  // Predicated region
  $region2: #{h_sigmoid.1} parent=0 // pred_check
    _
  $region3: #{h_sigmoid.1} parent=0 // pred_check_branch
    %7 = sbr.rel (0) target = $region5
  $region4: #{h_sigmoid.1} parent=0 // pred_region
    _
  $region5: #{h_sigmoid.1} parent=0 // pred_fallthru
    _
  %v8 = vld [vmem:[%s0] sm:$0xff]
  %v9 = vld [vmem:[%s0 + $0x8] sm:$0xff]
  %v10 = vadd.f32 %v8, 3.0
  %v11 = vadd.f32 %v9, 3.0
  %v12 = vmax.f32 %v10, 0.0
  %v13 = vmax.f32 %v11, 0.0
  %v14 = vmin.f32 %v12, 6.0
  %v15 = vmin.f32 %v13, 6.0
  %v16 = vmul.f32 %v14, 0.16666667
  %v17 = vmul.f32 %v15, 0.16666667
  %18 = vst [vmem:[%s1] sm:$0xff] %v16
  %19 = vst [vmem:[%s1 + $0x8] sm:$0xff] %v17
  // Predicated region
  $region6: #{h_sigmoid.1} parent=0 // pred_check
    _
  $region7: #{h_sigmoid.1} parent=0 // pred_check_branch
    %21 = sbr.rel (0) target = $region9
  $region8: #{h_sigmoid.1} parent=0 // pred_region
    _
  $region9: #{h_sigmoid.1} parent=0 // pred_fallthru
    _
  // Predicated region
  $region10: #{h_sigmoid.1} parent=0 // pred_check
    _
  $region11: #{h_sigmoid.1} parent=0 // pred_check_branch
    %23 = sbr.rel (0) target = $region13
  $region12: #{h_sigmoid.1} parent=0 // pred_region
    _
  $region13: #{h_sigmoid.1} parent=0 // pred_fallthru
    _

</llo_original>
